<compile_context>
chip_gen: v7x
topology: tpu7x:2x2x1
jax: 0.10.0
libtpu: 0.0.40
codegen_flags: <defaults>
</compile_context>

<pallas_src>
import functools

import jax
import jax.numpy as jnp
from jax.experimental import pallas as pl
from jax.experimental.pallas import tpu as pltpu

_LANES = 128


def _sn_dis_loss_kernel(pos_ref, neg_ref, out_ref, acc_p_ref, acc_n_ref, *,
                        tr, steps, nblk_pos, nblk_neg, n_pos, n_neg,
                        mask_pos, mask_neg, w_inv_pos, w_inv_neg):
    c = pl.program_id(0)          # slice axis ("parallel": split across TensorCores)
    j = pl.program_id(1)          # sequential accumulation axis ("arbitrary")
    g = c * steps + j             # global block index along the flattened rows

    @pl.when(j == 0)
    def _init():
        acc_p_ref[...] = jnp.zeros_like(acc_p_ref)
        acc_n_ref[...] = jnp.zeros_like(acc_n_ref)

    def hinge_partial(ref, negate, n_valid, needs_mask):
        x = ref[...].astype(jnp.float32)
        h = jnp.maximum((1.0 - x) if negate else (1.0 + x), 0.0)
        if needs_mask:
            # Mask elements past the true size (covers both the <128-elem tail pad and
            # the undefined rows of a partial edge block).  where() is NaN/Inf safe.
            row = jax.lax.broadcasted_iota(jnp.int32, (tr, _LANES), 0)
            lane = jax.lax.broadcasted_iota(jnp.int32, (tr, _LANES), 1)
            elem = (g * tr + row) * _LANES + lane
            h = jnp.where(elem < n_valid, h, 0.0)
        # Reduce the (tr,128) tile to a single (8,128) vreg with pure VALU adds
        # (layout-preserving split of the sublane axis; no cross-lane XLU work here).
        return h.reshape(tr // 8, 8, _LANES).sum(axis=0)

    @pl.when(g < nblk_pos)
    def _acc_pos():
        acc_p_ref[...] += hinge_partial(pos_ref, True, n_pos, mask_pos)

    @pl.when(g < nblk_neg)
    def _acc_neg():
        acc_n_ref[...] += hinge_partial(neg_ref, False, n_neg, mask_neg)

    @pl.when(j == steps - 1)
    def _finalize():
        # weight/mean scaling folded in; the tiny cross-lane sum happens in the wrapper.
        out_ref[0] = acc_p_ref[...] * w_inv_pos + acc_n_ref[...] * w_inv_neg


def _as_lane_rows(x):
    """Lane-dense (rows, 128) view of x; only a <128-element tail is ever padded."""
    n = int(x.size)
    rows = max(1, pl.cdiv(n, _LANES))
    flat = x.reshape(-1)
    if rows * _LANES != n:
        # Pad value is irrelevant: these elements are masked in-kernel.
        flat = jnp.pad(flat, (0, rows * _LANES - n))
    return flat.reshape(rows, _LANES), n


def _default_tile_rows():
    # Bigger tiles on v7x (smaller per-TC VMEM but much faster HBM, so the fixed
    # per-step grid overhead bites sooner at v6e-sized tiles).
    try:
        vmem = pltpu.get_tpu_info().vmem_capacity_bytes
        return 8192 if vmem <= (96 << 20) else 4096
    except Exception:
        return 4096


def sn_dis_loss(pos, neg, weight=1.0, tile_rows=None):
    """weight * (mean(relu(1 - pos)) + mean(relu(1 + neg))), fused in one Pallas kernel."""
    pos2, n_pos = _as_lane_rows(pos)
    neg2, n_neg = _as_lane_rows(neg)
    rows_pos, rows_neg = pos2.shape[0], neg2.shape[0]

    # dtype-aware sublane multiple: (8,128) f32 tiles, (16,128) bf16, (32,128) int8/fp8.
    min_item = min(pos2.dtype.itemsize, neg2.dtype.itemsize)
    sub = max(8, 32 // int(min_item))

    if tile_rows is None:
        tile_rows = _default_tile_rows()
    tr = max(sub, min(int(tile_rows), max(rows_pos, rows_neg)))
    tr = pl.cdiv(tr, sub) * sub                      # round up to the sublane multiple

    nblk_pos = pl.cdiv(rows_pos, tr)
    nblk_neg = pl.cdiv(rows_neg, tr)
    nblk = max(nblk_pos, nblk_neg)

    # Split the row range over a leading "parallel" axis: on v7x each TensorCore streams
    # half the data with its own accumulators/output; on 1-core chips it runs serially.
    n_slices = 2 if nblk >= 4 else 1
    steps = pl.cdiv(nblk, n_slices)

    # Masking is only needed when the accumulated blocks cover more than n elements.
    mask_pos = n_pos != nblk_pos * tr * _LANES
    mask_neg = n_neg != nblk_neg * tr * _LANES

    w = float(weight)
    w_inv_pos = (w / n_pos) if n_pos else float("nan")   # mean of empty -> nan (torch-like)
    w_inv_neg = (w / n_neg) if n_neg else float("nan")

    kernel = functools.partial(
        _sn_dis_loss_kernel,
        tr=tr, steps=steps, nblk_pos=nblk_pos, nblk_neg=nblk_neg,
        n_pos=n_pos, n_neg=n_neg, mask_pos=mask_pos, mask_neg=mask_neg,
        w_inv_pos=w_inv_pos, w_inv_neg=w_inv_neg)

    # Clamp each input's index_map to its own last block: once a slice runs past that
    # input's data the block index stops changing, so Pallas issues no further DMAs.
    pos_map = lambda c, j: (jnp.minimum(c * steps + j, nblk_pos - 1), 0)
    neg_map = lambda c, j: (jnp.minimum(c * steps + j, nblk_neg - 1), 0)

    vmem_bytes = int(
        2 * tr * _LANES * (pos2.dtype.itemsize + neg2.dtype.itemsize)  # double-buffered inputs
        + 4 * 8 * _LANES * 4                                           # accumulators + out blocks
        + (8 << 20))                                                   # compiler headroom

    partials = pl.pallas_call(
        kernel,
        out_shape=jax.ShapeDtypeStruct((n_slices, 8, _LANES), jnp.float32),
        grid=(n_slices, steps),
        in_specs=[
            pl.BlockSpec((tr, _LANES), pos_map),
            pl.BlockSpec((tr, _LANES), neg_map),
        ],
        out_specs=pl.BlockSpec((1, 8, _LANES), lambda c, j: (c, 0, 0)),
        scratch_shapes=[pltpu.VMEM((8, _LANES), jnp.float32),
                        pltpu.VMEM((8, _LANES), jnp.float32)],
        compiler_params=pltpu.CompilerParams(
            dimension_semantics=("parallel", "arbitrary"),
            vmem_limit_bytes=vmem_bytes),
    )(pos2, neg2)

    # Tiny epilogue: sum n_slices * 1024 already-scaled partials into the final scalar.
    return jnp.sum(partials)


# -------------------------------- reference --------------------------------
def ref_sn_dis_loss(pos, neg, weight=1.0):
    return weight * (jnp.mean(jax.nn.relu(1.0 - pos)) + jnp.mean(jax.nn.relu(1.0 + neg)))


if __name__ == "__main__":
    key = jax.random.PRNGKey(0)
    k1, k2, k3, k4 = jax.random.split(key, 4)

    # Discriminator outputs for the "real" (pos) and "fake" (neg) batches.
    pos = jax.random.normal(k1, (2, 4, 16, 16), jnp.float32)
    neg = jax.random.normal(k2, (2, 4, 16, 16), jnp.float32)
    loss = jax.block_until_ready(sn_dis_loss(pos, neg, weight=1.0))
    ref = ref_sn_dis_loss(pos, neg, weight=1.0)
    assert loss.shape == (), loss.shape
    assert jnp.allclose(loss, ref, atol=1e-5, rtol=1e-5), (float(loss), float(ref))

    # Ragged / mismatched sizes with a small tile: exercises the multi-step accumulator,
    # the 2-slice parallel axis, per-input block gating, clamped index_maps and the
    # in-kernel tail mask (neg size 1155 is not a multiple of 128).
    pos_b = jax.random.normal(k3, (8, 4, 32, 32), jnp.float32)   # 32768 elements
    neg_b = jax.random.normal(k4, (3, 5, 7, 11), jnp.float32)    # 1155 elements
    loss_b = jax.block_until_ready(sn_dis_loss(pos_b, neg_b, weight=2.0, tile_rows=32))
    ref_b = ref_sn_dis_loss(pos_b, neg_b, weight=2.0)
    assert jnp.allclose(loss_b, ref_b, atol=1e-5, rtol=1e-5), (float(loss_b), float(ref_b))

    print("KERNEL_OK")
</pallas_src>

<mosaic_0001>
module attributes {stable_mosaic.version = 11 : i64} {
  func.func @_sn_dis_loss_kernel(%arg0: i32, %arg1: i32, %arg2: memref<16x128xf32, #tpu.memory_space<vmem>>, %arg3: memref<16x128xf32, #tpu.memory_space<vmem>>, %arg4: memref<1x8x128xf32, #tpu.memory_space<vmem>>, %arg5: memref<8x128xf32, #tpu.memory_space<vmem>>, %arg6: memref<8x128xf32, #tpu.memory_space<vmem>>) attributes {dimension_semantics = [#tpu.dimension_semantics<parallel>, #tpu.dimension_semantics<arbitrary>], iteration_bounds = array<i64: 1, 1>, scalar_prefetch = 0 : i64, scratch_operands = 2 : i64, tpu.core_type = #tpu.core_type<tc>, window_params = [{transform_indices = @transform_0, window_bounds = array<i64: 16, 128>}, {transform_indices = @transform_1, window_bounds = array<i64: 16, 128>}, {transform_indices = @transform_2, window_bounds = array<i64: 1, 8, 128>}]} {
    %c1_i32 = arith.constant 1 : i32
    %0 = arith.muli %arg0, %c1_i32 : i32
    %1 = arith.addi %0, %arg1 : i32
    %c0_i32 = arith.constant 0 : i32
    %2 = arith.cmpi eq, %arg1, %c0_i32 : i32
    %3 = arith.extui %2 : i1 to i32
    %c0_i32_0 = arith.constant 0 : i32
    %4 = arith.cmpi ne, %3, %c0_i32_0 : i32
    scf.if %4 {
      %cst = arith.constant 0.000000e+00 : f32
      %14 = vector.broadcast %cst : f32 to vector<8x128xf32>
      %c0 = arith.constant 0 : index
      %c0_7 = arith.constant 0 : index
      %15 = vector.load %arg5[%c0, %c0_7] : memref<8x128xf32, #tpu.memory_space<vmem>>, vector<8x128xf32>
      tpu.vector_store %arg5[%c0, %c0_7], %14 {strides = array<i32>} : memref<8x128xf32, #tpu.memory_space<vmem>>, vector<8x128xf32>,
      %cst_8 = arith.constant 0.000000e+00 : f32
      %16 = vector.broadcast %cst_8 : f32 to vector<8x128xf32>
      %c0_9 = arith.constant 0 : index
      %c0_10 = arith.constant 0 : index
      %17 = vector.load %arg6[%c0_9, %c0_10] : memref<8x128xf32, #tpu.memory_space<vmem>>, vector<8x128xf32>
      tpu.vector_store %arg6[%c0_9, %c0_10], %16 {strides = array<i32>} : memref<8x128xf32, #tpu.memory_space<vmem>>, vector<8x128xf32>,
    } else {
    }
    %c1_i32_1 = arith.constant 1 : i32
    %5 = arith.cmpi slt, %1, %c1_i32_1 : i32
    %6 = arith.extui %5 : i1 to i32
    %c0_i32_2 = arith.constant 0 : i32
    %7 = arith.cmpi ne, %6, %c0_i32_2 : i32
    scf.if %7 {
      %c0 = arith.constant 0 : index
      %c0_7 = arith.constant 0 : index
      %14 = vector.load %arg5[%c0, %c0_7] : memref<8x128xf32, #tpu.memory_space<vmem>>, vector<8x128xf32>
      %c0_8 = arith.constant 0 : index
      %c0_9 = arith.constant 0 : index
      %15 = vector.load %arg2[%c0_8, %c0_9] : memref<16x128xf32, #tpu.memory_space<vmem>>, vector<16x128xf32>
      %cst = arith.constant 1.000000e+00 : f32
      %16 = vector.broadcast %cst : f32 to vector<16x128xf32>
      %17 = arith.subf %16, %15 : vector<16x128xf32>
      %cst_10 = arith.constant 0.000000e+00 : f32
      %18 = vector.broadcast %cst_10 : f32 to vector<16x128xf32>
      %19 = arith.maximumf %17, %18 : vector<16x128xf32>
      %20 = vector.shape_cast %19 : vector<16x128xf32> to vector<2x8x128xf32>
      %cst_11 = arith.constant dense<0.000000e+00> : vector<8x128xf32>
      %21 = vector.multi_reduction <add>, %20, %cst_11 [0] : vector<2x8x128xf32> to vector<8x128xf32>
      %22 = arith.addf %14, %21 : vector<8x128xf32>
      %c0_12 = arith.constant 0 : index
      %c0_13 = arith.constant 0 : index
      %23 = vector.load %arg5[%c0_12, %c0_13] : memref<8x128xf32, #tpu.memory_space<vmem>>, vector<8x128xf32>
      tpu.vector_store %arg5[%c0_12, %c0_13], %22 {strides = array<i32>} : memref<8x128xf32, #tpu.memory_space<vmem>>, vector<8x128xf32>,
    } else {
    }
    %c1_i32_3 = arith.constant 1 : i32
    %8 = arith.cmpi slt, %1, %c1_i32_3 : i32
    %9 = arith.extui %8 : i1 to i32
    %c0_i32_4 = arith.constant 0 : i32
    %10 = arith.cmpi ne, %9, %c0_i32_4 : i32
    scf.if %10 {
      %c0 = arith.constant 0 : index
      %c0_7 = arith.constant 0 : index
      %14 = vector.load %arg6[%c0, %c0_7] : memref<8x128xf32, #tpu.memory_space<vmem>>, vector<8x128xf32>
      %c0_8 = arith.constant 0 : index
      %c0_9 = arith.constant 0 : index
      %15 = vector.load %arg3[%c0_8, %c0_9] : memref<16x128xf32, #tpu.memory_space<vmem>>, vector<16x128xf32>
      %cst = arith.constant 1.000000e+00 : f32
      %16 = vector.broadcast %cst : f32 to vector<16x128xf32>
      %17 = arith.addf %16, %15 : vector<16x128xf32>
      %cst_10 = arith.constant 0.000000e+00 : f32
      %18 = vector.broadcast %cst_10 : f32 to vector<16x128xf32>
      %19 = arith.maximumf %17, %18 : vector<16x128xf32>
      %20 = vector.shape_cast %19 : vector<16x128xf32> to vector<2x8x128xf32>
      %cst_11 = arith.constant dense<0.000000e+00> : vector<8x128xf32>
      %21 = vector.multi_reduction <add>, %20, %cst_11 [0] : vector<2x8x128xf32> to vector<8x128xf32>
      %22 = arith.addf %14, %21 : vector<8x128xf32>
      %c0_12 = arith.constant 0 : index
      %c0_13 = arith.constant 0 : index
      %23 = vector.load %arg6[%c0_12, %c0_13] : memref<8x128xf32, #tpu.memory_space<vmem>>, vector<8x128xf32>
      tpu.vector_store %arg6[%c0_12, %c0_13], %22 {strides = array<i32>} : memref<8x128xf32, #tpu.memory_space<vmem>>, vector<8x128xf32>,
    } else {
    }
    %c0_i32_5 = arith.constant 0 : i32
    %11 = arith.cmpi eq, %arg1, %c0_i32_5 : i32
    %12 = arith.extui %11 : i1 to i32
    %c0_i32_6 = arith.constant 0 : i32
    %13 = arith.cmpi ne, %12, %c0_i32_6 : i32
    scf.if %13 {
      %c0 = arith.constant 0 : index
      %c0_7 = arith.constant 0 : index
      %14 = vector.load %arg5[%c0, %c0_7] : memref<8x128xf32, #tpu.memory_space<vmem>>, vector<8x128xf32>
      %cst = arith.constant 4.8828125E-4 : f32
      %15 = vector.broadcast %cst : f32 to vector<8x128xf32>
      %16 = arith.mulf %14, %15 : vector<8x128xf32>
      %c0_8 = arith.constant 0 : index
      %c0_9 = arith.constant 0 : index
      %17 = vector.load %arg6[%c0_8, %c0_9] : memref<8x128xf32, #tpu.memory_space<vmem>>, vector<8x128xf32>
      %cst_10 = arith.constant 4.8828125E-4 : f32
      %18 = vector.broadcast %cst_10 : f32 to vector<8x128xf32>
      %19 = arith.mulf %17, %18 : vector<8x128xf32>
      %20 = arith.addf %16, %19 : vector<8x128xf32>
      %c0_11 = arith.constant 0 : index
      %c0_12 = arith.constant 0 : index
      %c0_13 = arith.constant 0 : index
      %21 = vector.load %arg4[%c0_11, %c0_12, %c0_13] : memref<1x8x128xf32, #tpu.memory_space<vmem>>, vector<1x8x128xf32>
      %22 = vector.shape_cast %21 : vector<1x8x128xf32> to vector<8x128xf32>
      %23 = vector.shape_cast %20 : vector<8x128xf32> to vector<1x8x128xf32>
      tpu.vector_store %arg4[%c0_11, %c0_12, %c0_13], %23 {strides = array<i32>} : memref<1x8x128xf32, #tpu.memory_space<vmem>>, vector<1x8x128xf32>,
    } else {
    }
    return
  }
  func.func @transform_0(%arg0: i32, %arg1: i32) -> (i32, i32) {
    %c1_i32 = arith.constant 1 : i32
    %0 = arith.muli %arg0, %c1_i32 : i32
    %1 = arith.addi %0, %arg1 : i32
    %c0_i32 = arith.constant 0 : i32
    %2 = arith.minsi %1, %c0_i32 : i32
    %c0_i32_0 = arith.constant 0 : i32
    %c0_i32_1 = arith.constant 0 : i32
    return %2, %c0_i32_0 : i32, i32
  }
  func.func @transform_1(%arg0: i32, %arg1: i32) -> (i32, i32) {
    %c1_i32 = arith.constant 1 : i32
    %0 = arith.muli %arg0, %c1_i32 : i32
    %1 = arith.addi %0, %arg1 : i32
    %c0_i32 = arith.constant 0 : i32
    %2 = arith.minsi %1, %c0_i32 : i32
    %c0_i32_0 = arith.constant 0 : i32
    %c0_i32_1 = arith.constant 0 : i32
    return %2, %c0_i32_0 : i32, i32
  }
  func.func @transform_2(%arg0: i32, %arg1: i32) -> (i32, i32, i32) {
    %c0_i32 = arith.constant 0 : i32
    %c0_i32_0 = arith.constant 0 : i32
    %c0_i32_1 = arith.constant 0 : i32
    return %arg0, %c0_i32, %c0_i32_0 : i32, i32, i32
  }
}

</mosaic_0001>

<llo_original>
// kernel: tpu_custom_call.1
$region0: #{tpu_custom_call.1}
  #allocation0 [shape = 'u32[]', space=smem, size = 0x4, offset = 0x4, fixed_abs, tag = 'smem constant byte address 0x4 - core index']
  #allocation1 [shape = 'u32[144,128]{1,0:T(1,128)}', space=vmem, size = 0x12000, scoped, tag = 'internal scratch']
  #allocation2 [shape = 'f32[8,128]{1,0:T(8,128)}', space=vmem, size = 0x1000, scoped, tag = 'scratch operand']
  #allocation3 [shape = 'f32[8,128]{1,0:T(8,128)}', space=vmem, size = 0x1000, scoped, tag = 'scratch operand']
  %s0 = inlined_call_operand.hbm [shape: f32[16,128], index: 0, kind: input, shape index: {}]
  %s1 = inlined_call_operand.hbm [shape: f32[16,128], index: 1, kind: input, shape index: {}]
  %s2 = inlined_call_operand.hbm [shape: f32[1,8,128], index: 2, kind: output, shape index: {}]
  %s3 = sld [smem:[#allocation0]]
  $region38: #{tpu_custom_call.1} parent=0
    _
  %s5 = ssub.s32 1, %s3
  %s6 = scalar_select 0, %s5, %s3
  $region1: #{tpu_custom_call.1} parent=0
    #allocation4 [shape = 'u8[8192]{0}', space=vmem, size = 0x2000, scoped, tag = 'input window, operand 0, single buffered']
    #allocation5 [shape = 's32[1]{0}', space=sflag, size = 0x4, scoped, tag = 'scoped memory for tpu_custom_call.1']
    #allocation6 [shape = 's32[1]{0}', space=sflag, size = 0x4, scoped, tag = 'scoped memory for tpu_custom_call.1']
    #allocation7 [shape = 'u8[8192]{0}', space=vmem, size = 0x2000, scoped, tag = 'input window, operand 1, single buffered']
    #allocation8 [shape = 's32[1]{0}', space=sflag, size = 0x4, scoped, tag = 'scoped memory for tpu_custom_call.1']
    #allocation9 [shape = 'u8[4096]{0}', space=vmem, size = 0x1000, scoped, tag = 'output window, operand 0, single buffered']
    %7 = vsyncpa [#allocation5], 0
    %8 = vsyncpa [#allocation8], 0
    %9 = vsyncpa [#allocation6], 0
    // Predicated region
    $region2: #{tpu_custom_call.1} parent=1 // pred_check
      _
    $region3: #{tpu_custom_call.1} parent=1 // pred_check_branch
      %11 = sbr.rel (0) target = $region5
    $region4: #{tpu_custom_call.1} parent=1 // pred_region
      %s12 = sadd.s32 0, 0
      %p13 = scmp.lt.s32.totalorder %s12, 0
      %s14 = scalar_select %p13, %s12, 0
      %s15 = smul.u32 2, %s14
      %s17 = ssub.s32 256, 256
      %18 = vsyncadd [#allocation5], %s17
      %s19 = smul.addr %s15, 128
      %s20 = scalar_lea.hbm %s0, %s19
      %s21 = sshll.u32 [#allocation4], 4
      %s22 = int_to_ptr.vmem [resolvable:$true] %s21
      %27 = dma.hbm_to_vmem [thread:$0]  %s20, 256, %s22, [#allocation5], 128, 128, 8
    $region5: #{tpu_custom_call.1} parent=1 // pred_fallthru
      _
    // Predicated region
    $region6: #{tpu_custom_call.1} parent=1 // pred_check
      _
    $region7: #{tpu_custom_call.1} parent=1 // pred_check_branch
      %29 = sbr.rel (0) target = $region9
    $region8: #{tpu_custom_call.1} parent=1 // pred_region
      %s30 = sadd.s32 0, 0
      %p31 = scmp.lt.s32.totalorder %s30, 0
      %s32 = scalar_select %p31, %s30, 0
      %s33 = smul.u32 2, %s32
      %s35 = ssub.s32 256, 256
      %36 = vsyncadd [#allocation8], %s35
      %s37 = smul.addr %s33, 128
      %s38 = scalar_lea.hbm %s1, %s37
      %s39 = sshll.u32 [#allocation7], 4
      %s40 = int_to_ptr.vmem [resolvable:$true] %s39
      %45 = dma.hbm_to_vmem [thread:$0]  %s38, 256, %s40, [#allocation8], 128, 128, 8
    $region9: #{tpu_custom_call.1} parent=1 // pred_fallthru
      _
    // Predicated region
    $region10: #{tpu_custom_call.1} parent=1 // pred_check
      _
    $region11: #{tpu_custom_call.1} parent=1 // pred_check_branch
      %47 = sbr.rel (0) target = $region13
    $region12: #{tpu_custom_call.1} parent=1 // pred_region
      %48 = dma.done [#allocation5], 256
    $region13: #{tpu_custom_call.1} parent=1 // pred_fallthru
      _
    // Predicated region
    $region14: #{tpu_custom_call.1} parent=1 // pred_check
      _
    $region15: #{tpu_custom_call.1} parent=1 // pred_check_branch
      %50 = sbr.rel (0) target = $region17
    $region16: #{tpu_custom_call.1} parent=1 // pred_region
      %51 = dma.done [#allocation8], 256
    $region17: #{tpu_custom_call.1} parent=1 // pred_fallthru
      _
    %s52 = sadd.s32 0, 0
    %p53 = scmp.lt.s32.totalorder %s52, 0
    %s54 = scalar_select %p53, %s52, 0
    %s55 = smul.u32 2, %s54
    %s56 = sadd.s32 0, 0
    %p57 = scmp.lt.s32.totalorder %s56, 0
    %s58 = scalar_select %p57, %s56, 0
    %s59 = smul.u32 2, %s58
    %s60 = sadd.s32 0, 0
    %p61 = scmp.eq.s32.totalorder 0, 0
    // Predicated region
    $region18: #{tpu_custom_call.1} parent=1 // pred_check
      %p62 = pneg %p61
    $region19: #{tpu_custom_call.1} parent=1 // pred_check_branch
      %64 = sbr.rel (%p62) target = $region21
    $region20: #{tpu_custom_call.1} parent=1 // pred_region
      %65 = vst [vmem:[#allocation2] sm:$0xff] 0.0
      %66 = vst [vmem:[#allocation3] sm:$0xff] 0.0
    $region21: #{tpu_custom_call.1} parent=1 // pred_fallthru
      _
    %p67 = scmp.lt.s32.totalorder %s60, 1
    // Predicated region
    $region22: #{tpu_custom_call.1} parent=1 // pred_check
      %p68 = pneg %p67
    $region23: #{tpu_custom_call.1} parent=1 // pred_check_branch
      %70 = sbr.rel (%p68) target = $region25
    $region24: #{tpu_custom_call.1} parent=1 // pred_region
      %v71 = vld [vmem:[#allocation2] sm:$0xff]
      %v72 = vld [vmem:[#allocation4] sm:$0xff]
      %v73 = vld [vmem:[#allocation4 + $0x8] sm:$0xff]
      %v74 = vsub.f32 1.0, %v72
      %v75 = vsub.f32 1.0, %v73
      %v76 = vmax.f32 %v74, 0.0
      %v77 = vmax.f32 %v75, 0.0
      %v78 = vadd.f32 %v76, %v77
      %v79 = vadd.f32 %v71, %v78
      %80 = vst [vmem:[#allocation2] sm:$0xff] %v79
      %v81 = vld [vmem:[#allocation3] sm:$0xff]
      %v82 = vld [vmem:[#allocation7] sm:$0xff]
      %v83 = vld [vmem:[#allocation7 + $0x8] sm:$0xff]
      %v84 = vadd.f32 %v82, 1.0
      %v85 = vadd.f32 %v83, 1.0
      %v86 = vmax.f32 %v84, 0.0
      %v87 = vmax.f32 %v85, 0.0
      %v88 = vadd.f32 %v86, %v87
      %v89 = vadd.f32 %v81, %v88
      %90 = vst [vmem:[#allocation3] sm:$0xff] %v89
    $region25: #{tpu_custom_call.1} parent=1 // pred_fallthru
      _
    // Predicated region
    $region26: #{tpu_custom_call.1} parent=1 // pred_check
      %p91 = pneg %p61
    $region27: #{tpu_custom_call.1} parent=1 // pred_check_branch
      %93 = sbr.rel (%p91) target = $region29
    $region28: #{tpu_custom_call.1} parent=1 // pred_region
      %v94 = vld [vmem:[#allocation2] sm:$0xff]
      %v95 = vmul.f32 %v94, 0.00048828125
      %v96 = vld [vmem:[#allocation3] sm:$0xff]
      %v97 = vmul.f32 %v96, 0.00048828125
      %v98 = vadd.f32 %v95, %v97
      %99 = vst [vmem:[#allocation9] sm:$0xff] %v98
    $region29: #{tpu_custom_call.1} parent=1 // pred_fallthru
      _
    // Predicated region
    $region30: #{tpu_custom_call.1} parent=1 // pred_check
      _
    $region31: #{tpu_custom_call.1} parent=1 // pred_check_branch
      %101 = sbr.rel (0) target = $region33
    $region32: #{tpu_custom_call.1} parent=1 // pred_region
      %s103 = ssub.s32 128, 128
      %104 = vsyncadd [#allocation6], %s103
      %s106 = sshll.u32 [#allocation9], 4
      %s107 = int_to_ptr.vmem [resolvable:$true] %s106
      %109 = dma.vmem_to_hbm [thread:$0]  %s107, 128, %s2, [#allocation6]
    $region33: #{tpu_custom_call.1} parent=1 // pred_fallthru
      _
    // Predicated region
    $region34: #{tpu_custom_call.1} parent=1 // pred_check
      _
    $region35: #{tpu_custom_call.1} parent=1 // pred_check_branch
      %111 = sbr.rel (0) target = $region37
    $region36: #{tpu_custom_call.1} parent=1 // pred_region
      %112 = dma.done [#allocation6], 128
    $region37: #{tpu_custom_call.1} parent=1 // pred_fallthru
      _
    %113 = vsyncpa [#allocation5], 1
    %114 = vsyncpa [#allocation8], 1
    %115 = vsyncpa [#allocation6], 1

</llo_original>
